<compile_context>
chip_gen: v7x
topology: tpu7x:2x2x1
jax: 0.10.0
libtpu: 0.0.40
codegen_flags: <defaults>
</compile_context>

<pallas_src>
import functools

import numpy as np
import jax
import jax.numpy as jnp
from jax.experimental import pallas as pl
from jax.experimental.pallas import tpu as pltpu

WINDOW = 10          # detect_zones_batch default window_size
VAR_THRESH = 0.1     # detect_zones_batch default variance_threshold
LANE = 128
SUBLANE = 8


def _vmem():
    return pl.BlockSpec(memory_space=pltpu.MemorySpace.VMEM)


def _smem():
    return pl.BlockSpec(memory_space=pltpu.MemorySpace.SMEM)


def _round_up(n, m):
    return ((n + m - 1) // m) * m


def _bytes(*arrs):
    return int(sum(int(a.size) * a.dtype.itemsize for a in arrs))


def _compiler_params(*arrs):
    need = _bytes(*arrs)
    limit = int(min(max(2 * need + (4 << 20), 16 << 20), 64 << 20))
    return pltpu.CompilerParams(vmem_limit_bytes=limit)


# --------------------------------------------------------------------------
# Shared physics-loss math (values already resident in vregs).
# --------------------------------------------------------------------------
def _physics_math(imp_n, seis, sc, wav_ref, b_real, l_real):
    """Physics loss of the torch wrapper. Returns a (1, 1) f32 value."""
    B, L = imp_n.shape                     # padded shapes
    Lw = l_real - WINDOW + 1
    pad_left = WINDOW // 2
    wv_len = wav_ref.shape[0]
    m = wv_len // 2

    col = jax.lax.broadcasted_iota(jnp.int32, (B, L), 1)

    # ---- detect_zones_batch: unbiased sliding-window variance, two passes.
    #      Window sums = static XLU lane-rolls + VPU FMAs; re-roll on the 2nd
    #      pass instead of keeping WINDOW copies live (avoids vreg spills).
    s1 = seis
    for k in range(1, WINDOW):
        s1 = s1 + pltpu.roll(seis, shift=L - k, axis=1)    # out[t] = seis[t+k]
    mean = s1 * (1.0 / WINDOW)
    d0 = seis - mean
    ssq = d0 * d0
    for k in range(1, WINDOW):
        d = pltpu.roll(seis, shift=L - k, axis=1) - mean
        ssq = ssq + d * d
    local_var = ssq * (1.0 / (WINDOW - 1.0))               # valid cols [0, Lw)

    # F.pad(..., mode='replicate'): one roll + static boundary slices.
    shifted = pltpu.roll(local_var, shift=pad_left, axis=1)  # out[t]=lv[t-pad_left]
    left_val = local_var[:, 0:1]
    right_val = local_var[:, Lw - 1:Lw]
    padded_var = jnp.where(col < pad_left, left_val,
                           jnp.where(col >= pad_left + Lw, right_val, shifted))
    if l_real < L:
        max_src = jnp.where(col < l_real, padded_var, 0.0)   # exclude lane pad
    else:
        max_src = padded_var
    max_var = jnp.max(max_src, axis=-1, keepdims=True)
    # divide-free zone test (both sides are non-negative -> identical booleans)
    zones = padded_var < VAR_THRESH * (max_var + 1e-8)

    # ---- per-sample scalers packed as (B, 4): imp_mu, imp_sd, s_mu, 1/s_sd.
    imp_mu = sc[:, 0:1]
    imp_sd = sc[:, 1:2]
    s_mu = sc[:, 2:3]
    inv_s_sd = sc[:, 3:4]
    imp_phys = imp_n * imp_sd + imp_mu

    # ---- reflection coefficients: shift-by-one is an XLU roll, col 0 masked.
    ip_prev = pltpu.roll(imp_phys, shift=1, axis=1)          # out[t] = ip[t-1]
    interior = col >= 1
    rc = jnp.where(interior,
                   (imp_phys - ip_prev) / (imp_phys + ip_prev + 1e-10),
                   0.0)

    # ---- F.conv1d(rc, flip(wavelet), padding=Wv//2) as Wv roll+FMA taps.
    #      seis_pred[t] = sum_k wavelet[k] * rc[t + m - k], rc out of [0,l_real) = 0.
    seis_pred = jnp.zeros_like(rc)
    for k in range(wv_len):
        d = m - k                                            # static tap offset
        w_k = wav_ref[k]                                     # SMEM scalar tap
        if d == 0:
            tap = rc
        elif d > 0:
            tap = jnp.where(col <= l_real - 1 - d,
                            pltpu.roll(rc, shift=L - d, axis=1), 0.0)
        else:
            tap = jnp.where(col >= -d,
                            pltpu.roll(rc, shift=-d, axis=1), 0.0)
        seis_pred = seis_pred + w_k * tap

    # ---- zone-weighted MSE + zone penalty (torch semantics for b_real <= 16).
    seis_pred_norm = (seis_pred - s_mu) * inv_s_sd
    err = (seis_pred_norm - seis) ** 2
    werr = jnp.where(zones, 2.0 * err, err)
    diff = jnp.where(interior & zones, jnp.abs(imp_phys - ip_prev), 0.0)

    live = None
    if b_real < B:
        live = jax.lax.broadcasted_iota(jnp.int32, (B, L), 0) < b_real
    if l_real < L:
        col_ok = col < l_real
        live = col_ok if live is None else (live & col_ok)
    if live is not None:
        werr = jnp.where(live, werr, 0.0)
        diff = jnp.where(live, diff, 0.0)

    mse_part = jnp.sum(werr, keepdims=True) * (1.0 / (b_real * l_real))
    penalty = jnp.sum(diff, keepdims=True) * (0.1 / (b_real * (l_real - 1)))
    return mse_part + penalty


# --------------------------------------------------------------------------
# Kernels
# --------------------------------------------------------------------------
def _model_kernel(x_ref, w_ref, b_ref, o_ref):
    x16 = x_ref[...].astype(jnp.bfloat16)                    # bf16 MXU path
    o_ref[...] = jnp.tanh(
        jnp.dot(x16, w_ref[...], preferred_element_type=jnp.float32)
        + b_ref[...])


def _physics_kernel(imp_ref, seis_ref, sc_ref, wav_ref, loss_ref, *,
                    b_real, l_real):
    loss_ref[...] = _physics_math(imp_ref[...], seis_ref[...], sc_ref[...],
                                  wav_ref, b_real, l_real)


def _fused_kernel(x_ref, w_ref, b_ref, seis_ref, sc_ref, wav_ref,
                  imp_ref, loss_ref, *, b_real, l_real):
    # base-model forward fused with the physics loss: the normalized impedance
    # never round-trips through HBM.
    x16 = x_ref[...].astype(jnp.bfloat16)
    imp_n = jnp.tanh(
        jnp.dot(x16, w_ref[...], preferred_element_type=jnp.float32)
        + b_ref[...])
    imp_ref[...] = imp_n
    loss_ref[...] = _physics_math(imp_n, seis_ref[...], sc_ref[...], wav_ref,
                                  b_real, l_real)


# --------------------------------------------------------------------------
# Jit-cached entry points (no per-call host work)
# --------------------------------------------------------------------------
@jax.jit
def _model_call(x, w, b):
    bp, lp = x.shape
    ce = pl.CostEstimate(flops=2 * bp * lp * lp,
                         transcendentals=bp * lp,
                         bytes_accessed=_bytes(x, w, b) + 4 * bp * lp)
    return pl.pallas_call(
        _model_kernel,
        out_shape=jax.ShapeDtypeStruct((bp, lp), jnp.float32),
        in_specs=[_vmem()] * 3,
        out_specs=_vmem(),
        compiler_params=_compiler_params(x, w, b),
        cost_estimate=ce,
    )(x, w, b)


@functools.partial(jax.jit, static_argnames=("b_real", "l_real"))
def _physics_call(imp, seis, scalers, wavelet, *, b_real, l_real):
    bp, lp = imp.shape
    wv = int(wavelet.shape[0])
    ce = pl.CostEstimate(flops=bp * lp * (6 * WINDOW + 3 * wv + 40),
                         transcendentals=0,
                         bytes_accessed=_bytes(imp, seis, scalers, wavelet) + 4)
    loss = pl.pallas_call(
        functools.partial(_physics_kernel, b_real=b_real, l_real=l_real),
        out_shape=jax.ShapeDtypeStruct((1, 1), jnp.float32),
        in_specs=[_vmem(), _vmem(), _vmem(), _smem()],
        out_specs=_vmem(),
        compiler_params=_compiler_params(imp, seis, scalers),
        cost_estimate=ce,
    )(imp, seis, scalers, wavelet)
    return loss[0, 0]


@functools.partial(jax.jit, static_argnames=("b_real", "l_real"))
def _fused_call(x, w, b, seis, scalers, wavelet, *, b_real, l_real):
    bp, lp = x.shape
    wv = int(wavelet.shape[0])
    ce = pl.CostEstimate(
        flops=2 * bp * lp * lp + bp * lp * (6 * WINDOW + 3 * wv + 40),
        transcendentals=bp * lp,
        bytes_accessed=_bytes(x, w, b, seis, scalers, wavelet) + 4 * bp * lp + 4)
    imp, loss = pl.pallas_call(
        functools.partial(_fused_kernel, b_real=b_real, l_real=l_real),
        out_shape=(jax.ShapeDtypeStruct((bp, lp), jnp.float32),
                   jax.ShapeDtypeStruct((1, 1), jnp.float32)),
        in_specs=[_vmem()] * 5 + [_smem()],
        out_specs=(_vmem(), _vmem()),
        compiler_params=_compiler_params(x, w, b, seis, scalers),
        cost_estimate=ce,
    )(x, w, b, seis, scalers, wavelet)
    return imp[:b_real, :l_real], loss[0, 0]


def _pad_2d(a, rows, cols):
    r, c = a.shape
    if r == rows and c == cols:
        return a
    return jnp.pad(a, ((0, rows - r), (0, cols - c)))


# --------------------------------------------------------------------------
# Wrapper (mirrors the torch nn.Module)
# --------------------------------------------------------------------------
class NormalizedPhysicsWrapper:
    """JAX/Pallas port of the torch NormalizedPhysicsWrapper.

    `forward_and_physics_loss` is the recommended (fused) training path.
    `forward` / `physics_loss` mirror the torch API as separate kernels.
    """

    def __init__(self, model_w, model_b,
                 seismic_means, seismic_stds, impedance_means, impedance_stds):
        model_w = jnp.asarray(model_w, jnp.float32)
        model_b = jnp.asarray(model_b, jnp.float32).reshape(1, -1)
        self.l_real = int(model_w.shape[0])
        self.l_pad = _round_up(self.l_real, LANE)
        # W is the dominant byte mover: pad to lane-dense tiles ONCE and store
        # as bf16 (MXU-native, halves the HBM stream and VMEM footprint).
        self.model_w = _pad_2d(model_w, self.l_pad, self.l_pad).astype(jnp.bfloat16)
        self.model_b = _pad_2d(model_b, 1, self.l_pad)
        self.seismic_means = jnp.asarray(seismic_means, jnp.float32)
        self.seismic_stds = jnp.asarray(seismic_stds, jnp.float32)
        self.impedance_means = jnp.asarray(impedance_means, jnp.float32)
        self.impedance_stds = jnp.asarray(impedance_stds, jnp.float32)

    # -- torch API parity ---------------------------------------------------
    def forward(self, x, well_indices=None):
        # forward == self.model(x, well_indices); the synthetic base model
        # (tanh(x @ W + b)) ignores well_indices, like most backbones would.
        del well_indices
        x = jnp.asarray(x, jnp.float32)
        b_real, l_real = x.shape
        assert l_real == self.l_real
        b_pad = max(SUBLANE, _round_up(b_real, SUBLANE))
        x_p = _pad_2d(x, b_pad, self.l_pad)
        out = _model_call(x_p, self.model_w, self.model_b)
        return out[:b_real, :l_real]

    def physics_loss(self, impedance_pred, seismic_data, wavelet, well_indices):
        imp, seis, scalers, wav, b_real, l_real = self._prep(
            impedance_pred, seismic_data, wavelet, well_indices)
        return _physics_call(imp, seis, scalers, wav,
                             b_real=b_real, l_real=l_real)

    # -- fused fast path ------------------------------------------------------
    def forward_and_physics_loss(self, x, seismic_data, wavelet, well_indices):
        x_p, seis, scalers, wav, b_real, l_real = self._prep(
            x, seismic_data, wavelet, well_indices)
        assert l_real == self.l_real
        return _fused_call(x_p, self.model_w, self.model_b, seis, scalers, wav,
                           b_real=b_real, l_real=l_real)

    # -- host-side glue -------------------------------------------------------
    def _prep(self, arr2d, seismic_data, wavelet, well_indices):
        arr2d = jnp.asarray(arr2d, jnp.float32)
        seis = jnp.asarray(seismic_data, jnp.float32)
        wav = jnp.asarray(wavelet, jnp.float32)
        b_real, l_real = arr2d.shape
        assert seis.shape == (b_real, l_real)
        assert l_real > WINDOW
        # TODO(synk): even-length wavelets take torch's F.interpolate branch.
        assert wav.shape[0] % 2 == 1, "only odd wavelet lengths supported"
        # TODO(synk): B>16 changes the torch mini-batch zone-penalty semantics.
        assert b_real <= 16
        b_pad = max(SUBLANE, _round_up(b_real, SUBLANE))
        l_pad = _round_up(l_real, LANE)             # lane-dense vregs
        arr2d = _pad_2d(arr2d, b_pad, l_pad)
        seis = _pad_2d(seis, b_pad, l_pad)
        scalers = self._pack_scalers(well_indices, b_pad)
        return arr2d, seis, scalers, wav, b_real, l_real

    def _pack_scalers(self, well_indices, b_pad):
        idx = jnp.asarray(well_indices, jnp.int32).reshape(-1)
        if idx.shape[0] < b_pad:
            idx = jnp.concatenate(
                [idx, jnp.zeros((b_pad - idx.shape[0],), jnp.int32)])
        return jnp.stack([self.impedance_means[idx], self.impedance_stds[idx],
                          self.seismic_means[idx],
                          1.0 / self.seismic_stds[idx]],
                         axis=1).astype(jnp.float32)


# --------------------------------------------------------------------------
# Pure-JAX reference (sanity check of the kernel math)
# --------------------------------------------------------------------------
def physics_loss_reference(imp_pred, seismic, wavelet, well_idx,
                           imp_means, imp_stds, seis_means, seis_stds):
    B, L = imp_pred.shape
    Wv = wavelet.shape[0]
    Lw = L - WINDOW + 1
    idx = jnp.arange(Lw)[:, None] + jnp.arange(WINDOW)[None, :]
    windows = seismic[:, idx]                                  # [B, Lw, WINDOW]
    local_var = jnp.var(windows, axis=2, ddof=1)
    pad_left = WINDOW // 2
    pad_right = WINDOW - pad_left - 1
    padded = jnp.concatenate(
        [jnp.repeat(local_var[:, :1], pad_left, axis=1),
         local_var,
         jnp.repeat(local_var[:, -1:], pad_right, axis=1)], axis=1)
    maxv = jnp.max(padded, axis=1, keepdims=True)
    zones = (padded / (maxv + 1e-8)) < VAR_THRESH

    imp_mu = imp_means[well_idx][:, None]
    imp_sd = imp_stds[well_idx][:, None]
    s_mu = seis_means[well_idx][:, None]
    s_sd = seis_stds[well_idx][:, None]

    ip = imp_pred * imp_sd + imp_mu
    rc = jnp.zeros_like(ip)
    rc = rc.at[:, 1:].set((ip[:, 1:] - ip[:, :-1]) / (ip[:, 1:] + ip[:, :-1] + 1e-10))

    m = Wv // 2
    rc_pad = jnp.pad(rc, ((0, 0), (m, m)))
    pred = jnp.zeros_like(ip)
    for j in range(Wv):
        pred = pred + wavelet[j] * rc_pad[:, 2 * m - j: 2 * m - j + L]
    pred_n = (pred - s_mu) / s_sd

    err = (pred_n - seismic) ** 2
    w = jnp.where(zones, 2.0, 1.0)
    mse_part = jnp.mean(err * w)
    diff = jnp.abs(ip[:, 1:] - ip[:, :-1])
    penalty = 0.1 * jnp.mean(diff * zones[:, 1:].astype(jnp.float32))
    return mse_part + penalty


if __name__ == "__main__":
    B, L, NUM_WELLS, WAV_LEN = 8, 128, 3, 15
    key = jax.random.PRNGKey(0)
    kx, kw, ki = jax.random.split(key, 3)

    # deterministic normalized seismic with a low-variance (homogeneous) zone
    t = jnp.arange(L, dtype=jnp.float32)
    noise = jax.random.normal(kx, (B, L), dtype=jnp.float32)
    seismic = 0.8 * jnp.sin(2.0 * jnp.pi * 4.0 * t / L)[None, :] + 0.5 * noise
    flat = (t >= 40) & (t < 70)
    seismic = jnp.where(flat[None, :], 0.05 * noise, seismic).astype(jnp.float32)

    # deterministic "scalers" (one per well)
    imp_means = jnp.array([2500.0, 3000.0, 3500.0], jnp.float32)
    imp_stds = jnp.array([400.0, 500.0, 600.0], jnp.float32)
    seis_means = jnp.array([0.0, 0.05, -0.05], jnp.float32)
    seis_stds = jnp.array([1.0, 1.2, 0.9], jnp.float32)

    # Ricker wavelet (odd length -> no interpolate branch)
    tw = (np.arange(WAV_LEN) - WAV_LEN // 2).astype(np.float32)
    f = 0.15
    wav = (1.0 - 2.0 * (np.pi * f * tw) ** 2) * np.exp(-((np.pi * f * tw) ** 2))
    wavelet = jnp.asarray(wav, jnp.float32)

    well_indices = jax.random.randint(ki, (B,), 0, NUM_WELLS)

    # deterministic synthetic base-model parameters
    w1 = (jax.random.normal(kw, (L, L), dtype=jnp.float32) * 0.05).astype(jnp.float32)
    b1 = jnp.zeros((1, L), jnp.float32)

    wrapper = NormalizedPhysicsWrapper(w1, b1, seis_means, seis_stds,
                                       imp_means, imp_stds)

    # fused path: model forward + physics loss in ONE pallas_call
    imp_pred, loss = wrapper.forward_and_physics_loss(
        seismic, seismic, wavelet, well_indices)
    imp_pred = jax.block_until_ready(imp_pred)
    loss = jax.block_until_ready(loss)

    # torch-API-parity paths (separate forward + physics_loss kernels)
    imp_fwd = jax.block_until_ready(wrapper.forward(seismic, well_indices))
    loss_unfused = jax.block_until_ready(
        wrapper.physics_loss(imp_pred, seismic, wavelet, well_indices))

    # references (bf16 weights, f32 accumulate, same as the kernel)
    imp_ref = jnp.tanh(
        jnp.dot(seismic.astype(jnp.bfloat16), w1.astype(jnp.bfloat16),
                preferred_element_type=jnp.float32) + b1)
    loss_ref = physics_loss_reference(imp_pred, seismic, wavelet, well_indices,
                                      imp_means, imp_stds, seis_means, seis_stds)

    assert imp_pred.shape == (B, L)
    assert np.allclose(np.asarray(imp_pred), np.asarray(imp_ref),
                       rtol=2e-2, atol=5e-3)
    assert np.allclose(np.asarray(imp_fwd), np.asarray(imp_pred),
                       rtol=1e-3, atol=2e-3)
    assert np.isfinite(float(loss))
    assert abs(float(loss) - float(loss_ref)) <= 2e-2 * max(1.0, abs(float(loss_ref)))
    assert abs(float(loss_unfused) - float(loss)) <= 1e-3 * max(1.0, abs(float(loss)))

    # padded-batch path (B=4 -> padded to 8 sublanes inside the wrapper)
    B2 = 4
    imp2, loss2 = wrapper.forward_and_physics_loss(
        seismic[:B2], seismic[:B2], wavelet, well_indices[:B2])
    imp2 = jax.block_until_ready(imp2)
    loss2 = jax.block_until_ready(loss2)
    loss2_ref = physics_loss_reference(imp2, seismic[:B2], wavelet,
                                       well_indices[:B2],
                                       imp_means, imp_stds, seis_means, seis_stds)
    assert imp2.shape == (B2, L)
    assert np.isfinite(float(loss2))
    assert abs(float(loss2) - float(loss2_ref)) <= 2e-2 * max(1.0, abs(float(loss2_ref)))

    # non-multiple-of-128 trace length (L=100 -> lane-padded to 128 + masked)
    L3, B3 = 100, 4
    w3 = w1[:L3, :L3]
    b3 = jnp.zeros((1, L3), jnp.float32)
    wrapper3 = NormalizedPhysicsWrapper(w3, b3, seis_means, seis_stds,
                                        imp_means, imp_stds)
    seis3 = seismic[:B3, :L3]
    imp3, loss3 = wrapper3.forward_and_physics_loss(
        seis3, seis3, wavelet, well_indices[:B3])
    imp3 = jax.block_until_ready(imp3)
    loss3 = jax.block_until_ready(loss3)
    imp3_ref = jnp.tanh(
        jnp.dot(seis3.astype(jnp.bfloat16), w3.astype(jnp.bfloat16),
                preferred_element_type=jnp.float32) + b3)
    loss3_ref = physics_loss_reference(imp3, seis3, wavelet, well_indices[:B3],
                                       imp_means, imp_stds, seis_means, seis_stds)
    assert imp3.shape == (B3, L3)
    assert np.allclose(np.asarray(imp3), np.asarray(imp3_ref),
                       rtol=2e-2, atol=5e-3)
    assert np.isfinite(float(loss3))
    assert abs(float(loss3) - float(loss3_ref)) <= 2e-2 * max(1.0, abs(float(loss3_ref)))

    print("KERNEL_OK")
</pallas_src>

<mosaic_0001>
module attributes {stable_mosaic.version = 11 : i64} {
  func.func @_fused_kernel(%arg0: memref<8x128xf32, #tpu.memory_space<vmem>>, %arg1: memref<128x128xbf16, #tpu.memory_space<vmem>>, %arg2: memref<1x128xf32, #tpu.memory_space<vmem>>, %arg3: memref<8x128xf32, #tpu.memory_space<vmem>>, %arg4: memref<8x4xf32, #tpu.memory_space<vmem>>, %arg5: memref<15xf32, #tpu.memory_space<smem>>, %arg6: memref<8x128xf32, #tpu.memory_space<vmem>>, %arg7: memref<1x1xf32, #tpu.memory_space<vmem>>) attributes {dimension_semantics = [], scalar_prefetch = 0 : i64, scratch_operands = 0 : i64, tpu.core_type = #tpu.core_type<tc>} {
    %c0 = arith.constant 0 : index
    %c0_0 = arith.constant 0 : index
    %0 = vector.load %arg0[%c0, %c0_0] : memref<8x128xf32, #tpu.memory_space<vmem>>, vector<8x128xf32>
    %1 = arith.truncf %0 : vector<8x128xf32> to vector<8x128xbf16>
    %c0_1 = arith.constant 0 : index
    %c0_2 = arith.constant 0 : index
    %2 = vector.load %arg1[%c0_1, %c0_2] : memref<128x128xbf16, #tpu.memory_space<vmem>>, vector<128x128xbf16>
    %cst = arith.constant dense<0.000000e+00> : vector<8x128xf32>
    %3 = tpu.matmul %1, %2, %cst {dimension_numbers = #tpu.dot_dimension_numbers<[1], [0], [0], [1], [0, 0, 1, 1], [], []>} : vector<8x128xbf16>, vector<128x128xbf16>, vector<8x128xf32> -> vector<8x128xf32>
    %c0_3 = arith.constant 0 : index
    %c0_4 = arith.constant 0 : index
    %4 = vector.load %arg2[%c0_3, %c0_4] : memref<1x128xf32, #tpu.memory_space<vmem>>, vector<1x128xf32>
    %5 = vector.broadcast %4 : vector<1x128xf32> to vector<8x128xf32>
    %6 = arith.addf %3, %5 : vector<8x128xf32>
    %7 = math.tanh %6 : vector<8x128xf32>
    %c0_5 = arith.constant 0 : index
    %c0_6 = arith.constant 0 : index
    %8 = vector.load %arg6[%c0_5, %c0_6] : memref<8x128xf32, #tpu.memory_space<vmem>>, vector<8x128xf32>
    tpu.vector_store %arg6[%c0_5, %c0_6], %7 {strides = array<i32>} : memref<8x128xf32, #tpu.memory_space<vmem>>, vector<8x128xf32>,
    %c0_7 = arith.constant 0 : index
    %c0_8 = arith.constant 0 : index
    %9 = vector.load %arg3[%c0_7, %c0_8] : memref<8x128xf32, #tpu.memory_space<vmem>>, vector<8x128xf32>
    %c0_9 = arith.constant 0 : index
    %c0_10 = arith.constant 0 : index
    %10 = vector.load %arg4[%c0_9, %c0_10] : memref<8x4xf32, #tpu.memory_space<vmem>>, vector<8x4xf32>
    %11 = tpu.iota {dimensions = array<i32: 1>} : vector<8x128xi32>
    %c127_i32 = arith.constant 127 : i32
    %12 = tpu.dynamic_rotate %9 by %c127_i32 dim 1 : vector<8x128xf32>, i32 -> vector<8x128xf32>
    %13 = arith.addf %9, %12 : vector<8x128xf32>
    %c126_i32 = arith.constant 126 : i32
    %14 = tpu.dynamic_rotate %9 by %c126_i32 dim 1 : vector<8x128xf32>, i32 -> vector<8x128xf32>
    %15 = arith.addf %13, %14 : vector<8x128xf32>
    %c125_i32 = arith.constant 125 : i32
    %16 = tpu.dynamic_rotate %9 by %c125_i32 dim 1 : vector<8x128xf32>, i32 -> vector<8x128xf32>
    %17 = arith.addf %15, %16 : vector<8x128xf32>
    %c124_i32 = arith.constant 124 : i32
    %18 = tpu.dynamic_rotate %9 by %c124_i32 dim 1 : vector<8x128xf32>, i32 -> vector<8x128xf32>
    %19 = arith.addf %17, %18 : vector<8x128xf32>
    %c123_i32 = arith.constant 123 : i32
    %20 = tpu.dynamic_rotate %9 by %c123_i32 dim 1 : vector<8x128xf32>, i32 -> vector<8x128xf32>
    %21 = arith.addf %19, %20 : vector<8x128xf32>
    %c122_i32 = arith.constant 122 : i32
    %22 = tpu.dynamic_rotate %9 by %c122_i32 dim 1 : vector<8x128xf32>, i32 -> vector<8x128xf32>
    %23 = arith.addf %21, %22 : vector<8x128xf32>
    %c121_i32 = arith.constant 121 : i32
    %24 = tpu.dynamic_rotate %9 by %c121_i32 dim 1 : vector<8x128xf32>, i32 -> vector<8x128xf32>
    %25 = arith.addf %23, %24 : vector<8x128xf32>
    %c120_i32 = arith.constant 120 : i32
    %26 = tpu.dynamic_rotate %9 by %c120_i32 dim 1 : vector<8x128xf32>, i32 -> vector<8x128xf32>
    %27 = arith.addf %25, %26 : vector<8x128xf32>
    %c119_i32 = arith.constant 119 : i32
    %28 = tpu.dynamic_rotate %9 by %c119_i32 dim 1 : vector<8x128xf32>, i32 -> vector<8x128xf32>
    %29 = arith.addf %27, %28 : vector<8x128xf32>
    %cst_11 = arith.constant 1.000000e-01 : f32
    %30 = vector.broadcast %cst_11 : f32 to vector<8x128xf32>
    %31 = arith.mulf %29, %30 : vector<8x128xf32>
    %32 = arith.subf %9, %31 : vector<8x128xf32>
    %33 = arith.mulf %32, %32 : vector<8x128xf32>
    %c127_i32_12 = arith.constant 127 : i32
    %34 = tpu.dynamic_rotate %9 by %c127_i32_12 dim 1 : vector<8x128xf32>, i32 -> vector<8x128xf32>
    %35 = arith.subf %34, %31 : vector<8x128xf32>
    %36 = arith.mulf %35, %35 : vector<8x128xf32>
    %37 = arith.addf %33, %36 : vector<8x128xf32>
    %c126_i32_13 = arith.constant 126 : i32
    %38 = tpu.dynamic_rotate %9 by %c126_i32_13 dim 1 : vector<8x128xf32>, i32 -> vector<8x128xf32>
    %39 = arith.subf %38, %31 : vector<8x128xf32>
    %40 = arith.mulf %39, %39 : vector<8x128xf32>
    %41 = arith.addf %37, %40 : vector<8x128xf32>
    %c125_i32_14 = arith.constant 125 : i32
    %42 = tpu.dynamic_rotate %9 by %c125_i32_14 dim 1 : vector<8x128xf32>, i32 -> vector<8x128xf32>
    %43 = arith.subf %42, %31 : vector<8x128xf32>
    %44 = arith.mulf %43, %43 : vector<8x128xf32>
    %45 = arith.addf %41, %44 : vector<8x128xf32>
    %c124_i32_15 = arith.constant 124 : i32
    %46 = tpu.dynamic_rotate %9 by %c124_i32_15 dim 1 : vector<8x128xf32>, i32 -> vector<8x128xf32>
    %47 = arith.subf %46, %31 : vector<8x128xf32>
    %48 = arith.mulf %47, %47 : vector<8x128xf32>
    %49 = arith.addf %45, %48 : vector<8x128xf32>
    %c123_i32_16 = arith.constant 123 : i32
    %50 = tpu.dynamic_rotate %9 by %c123_i32_16 dim 1 : vector<8x128xf32>, i32 -> vector<8x128xf32>
    %51 = arith.subf %50, %31 : vector<8x128xf32>
    %52 = arith.mulf %51, %51 : vector<8x128xf32>
    %53 = arith.addf %49, %52 : vector<8x128xf32>
    %c122_i32_17 = arith.constant 122 : i32
    %54 = tpu.dynamic_rotate %9 by %c122_i32_17 dim 1 : vector<8x128xf32>, i32 -> vector<8x128xf32>
    %55 = arith.subf %54, %31 : vector<8x128xf32>
    %56 = arith.mulf %55, %55 : vector<8x128xf32>
    %57 = arith.addf %53, %56 : vector<8x128xf32>
    %c121_i32_18 = arith.constant 121 : i32
    %58 = tpu.dynamic_rotate %9 by %c121_i32_18 dim 1 : vector<8x128xf32>, i32 -> vector<8x128xf32>
    %59 = arith.subf %58, %31 : vector<8x128xf32>
    %60 = arith.mulf %59, %59 : vector<8x128xf32>
    %61 = arith.addf %57, %60 : vector<8x128xf32>
    %c120_i32_19 = arith.constant 120 : i32
    %62 = tpu.dynamic_rotate %9 by %c120_i32_19 dim 1 : vector<8x128xf32>, i32 -> vector<8x128xf32>
    %63 = arith.subf %62, %31 : vector<8x128xf32>
    %64 = arith.mulf %63, %63 : vector<8x128xf32>
    %65 = arith.addf %61, %64 : vector<8x128xf32>
    %c119_i32_20 = arith.constant 119 : i32
    %66 = tpu.dynamic_rotate %9 by %c119_i32_20 dim 1 : vector<8x128xf32>, i32 -> vector<8x128xf32>
    %67 = arith.subf %66, %31 : vector<8x128xf32>
    %68 = arith.mulf %67, %67 : vector<8x128xf32>
    %69 = arith.addf %65, %68 : vector<8x128xf32>
    %cst_21 = arith.constant 0.111111112 : f32
    %70 = vector.broadcast %cst_21 : f32 to vector<8x128xf32>
    %71 = arith.mulf %69, %70 : vector<8x128xf32>
    %c5_i32 = arith.constant 5 : i32
    %72 = tpu.dynamic_rotate %71 by %c5_i32 dim 1 : vector<8x128xf32>, i32 -> vector<8x128xf32>
    %73 = vector.extract_strided_slice %71 {offsets = [0, 0], sizes = [8, 1], strides = [1, 1]} : vector<8x128xf32> to vector<8x1xf32>
    %74 = vector.extract_strided_slice %71 {offsets = [0, 118], sizes = [8, 1], strides = [1, 1]} : vector<8x128xf32> to vector<8x1xf32>
    %c5_i32_22 = arith.constant 5 : i32
    %75 = vector.broadcast %c5_i32_22 : i32 to vector<8x128xi32>
    %76 = arith.cmpi slt, %11, %75 : vector<8x128xi32>
    %c124_i32_23 = arith.constant 124 : i32
    %77 = vector.broadcast %c124_i32_23 : i32 to vector<8x128xi32>
    %78 = arith.cmpi sge, %11, %77 : vector<8x128xi32>
    %79 = vector.shape_cast %74 : vector<8x1xf32> to vector<8x1xf32>
    %80 = vector.broadcast %79 : vector<8x1xf32> to vector<8x128xf32>
    %81 = arith.select %78, %80, %72 : vector<8x128xi1>, vector<8x128xf32>
    %82 = vector.shape_cast %73 : vector<8x1xf32> to vector<8x1xf32>
    %83 = vector.broadcast %82 : vector<8x1xf32> to vector<8x128xf32>
    %84 = arith.select %76, %83, %81 : vector<8x128xi1>, vector<8x128xf32>
    %cst_24 = arith.constant dense<0xFF800000> : vector<8xf32>
    %85 = vector.multi_reduction <maximumf>, %84, %cst_24 [1] : vector<8x128xf32> to vector<8xf32>
    %86 = vector.shape_cast %85 : vector<8xf32> to vector<8x1xf32>
    %cst_25 = arith.constant 9.99999993E-9 : f32
    %87 = vector.broadcast %cst_25 : f32 to vector<8x1xf32>
    %88 = arith.addf %86, %87 : vector<8x1xf32>
    %cst_26 = arith.constant 1.000000e-01 : f32
    %89 = vector.broadcast %cst_26 : f32 to vector<8x1xf32>
    %90 = arith.mulf %89, %88 : vector<8x1xf32>
    %91 = vector.broadcast %90 : vector<8x1xf32> to vector<8x128xf32>
    %92 = arith.cmpf olt, %84, %91 : vector<8x128xf32>
    %93 = vector.extract_strided_slice %10 {offsets = [0, 0], sizes = [8, 1], strides = [1, 1]} : vector<8x4xf32> to vector<8x1xf32>
    %94 = vector.extract_strided_slice %10 {offsets = [0, 1], sizes = [8, 1], strides = [1, 1]} : vector<8x4xf32> to vector<8x1xf32>
    %95 = vector.extract_strided_slice %10 {offsets = [0, 2], sizes = [8, 1], strides = [1, 1]} : vector<8x4xf32> to vector<8x1xf32>
    %96 = vector.extract_strided_slice %10 {offsets = [0, 3], sizes = [8, 1], strides = [1, 1]} : vector<8x4xf32> to vector<8x1xf32>
    %97 = vector.broadcast %94 : vector<8x1xf32> to vector<8x128xf32>
    %98 = arith.mulf %7, %97 : vector<8x128xf32>
    %99 = vector.broadcast %93 : vector<8x1xf32> to vector<8x128xf32>
    %100 = arith.addf %98, %99 : vector<8x128xf32>
    %c1_i32 = arith.constant 1 : i32
    %101 = tpu.dynamic_rotate %100 by %c1_i32 dim 1 : vector<8x128xf32>, i32 -> vector<8x128xf32>
    %c1_i32_27 = arith.constant 1 : i32
    %102 = vector.broadcast %c1_i32_27 : i32 to vector<8x128xi32>
    %103 = arith.cmpi sge, %11, %102 : vector<8x128xi32>
    %104 = arith.subf %100, %101 : vector<8x128xf32>
    %105 = arith.addf %100, %101 : vector<8x128xf32>
    %cst_28 = arith.constant 1.000000e-10 : f32
    %106 = vector.broadcast %cst_28 : f32 to vector<8x128xf32>
    %107 = arith.addf %105, %106 : vector<8x128xf32>
    %108 = arith.divf %104, %107 : vector<8x128xf32>
    %cst_29 = arith.constant 0.000000e+00 : f32
    %109 = vector.broadcast %cst_29 : f32 to vector<8x128xf32>
    %110 = arith.select %103, %108, %109 : vector<8x128xi1>, vector<8x128xf32>
    %cst_30 = arith.constant 0.000000e+00 : f32
    %111 = vector.broadcast %cst_30 : f32 to vector<8x128xf32>
    %c0_31 = arith.constant 0 : index
    %112 = memref.load %arg5[%c0_31] : memref<15xf32, #tpu.memory_space<smem>>
    %c120_i32_32 = arith.constant 120 : i32
    %113 = vector.broadcast %c120_i32_32 : i32 to vector<8x128xi32>
    %114 = arith.cmpi sle, %11, %113 : vector<8x128xi32>
    %c121_i32_33 = arith.constant 121 : i32
    %115 = tpu.dynamic_rotate %110 by %c121_i32_33 dim 1 : vector<8x128xf32>, i32 -> vector<8x128xf32>
    %cst_34 = arith.constant 0.000000e+00 : f32
    %116 = vector.broadcast %cst_34 : f32 to vector<8x128xf32>
    %117 = arith.select %114, %115, %116 : vector<8x128xi1>, vector<8x128xf32>
    %118 = vector.broadcast %112 : f32 to vector<8x128xf32>
    %119 = arith.mulf %118, %117 : vector<8x128xf32>
    %120 = arith.addf %111, %119 : vector<8x128xf32>
    %c1 = arith.constant 1 : index
    %121 = memref.load %arg5[%c1] : memref<15xf32, #tpu.memory_space<smem>>
    %c121_i32_35 = arith.constant 121 : i32
    %122 = vector.broadcast %c121_i32_35 : i32 to vector<8x128xi32>
    %123 = arith.cmpi sle, %11, %122 : vector<8x128xi32>
    %c122_i32_36 = arith.constant 122 : i32
    %124 = tpu.dynamic_rotate %110 by %c122_i32_36 dim 1 : vector<8x128xf32>, i32 -> vector<8x128xf32>
    %cst_37 = arith.constant 0.000000e+00 : f32
    %125 = vector.broadcast %cst_37 : f32 to vector<8x128xf32>
    %126 = arith.select %123, %124, %125 : vector<8x128xi1>, vector<8x128xf32>
    %127 = vector.broadcast %121 : f32 to vector<8x128xf32>
    %128 = arith.mulf %127, %126 : vector<8x128xf32>
    %129 = arith.addf %120, %128 : vector<8x128xf32>
    %c2 = arith.constant 2 : index
    %130 = memref.load %arg5[%c2] : memref<15xf32, #tpu.memory_space<smem>>
    %c122_i32_38 = arith.constant 122 : i32
    %131 = vector.broadcast %c122_i32_38 : i32 to vector<8x128xi32>
    %132 = arith.cmpi sle, %11, %131 : vector<8x128xi32>
    %c123_i32_39 = arith.constant 123 : i32
    %133 = tpu.dynamic_rotate %110 by %c123_i32_39 dim 1 : vector<8x128xf32>, i32 -> vector<8x128xf32>
    %cst_40 = arith.constant 0.000000e+00 : f32
    %134 = vector.broadcast %cst_40 : f32 to vector<8x128xf32>
    %135 = arith.select %132, %133, %134 : vector<8x128xi1>, vector<8x128xf32>
    %136 = vector.broadcast %130 : f32 to vector<8x128xf32>
    %137 = arith.mulf %136, %135 : vector<8x128xf32>
    %138 = arith.addf %129, %137 : vector<8x128xf32>
    %c3 = arith.constant 3 : index
    %139 = memref.load %arg5[%c3] : memref<15xf32, #tpu.memory_space<smem>>
    %c123_i32_41 = arith.constant 123 : i32
    %140 = vector.broadcast %c123_i32_41 : i32 to vector<8x128xi32>
    %141 = arith.cmpi sle, %11, %140 : vector<8x128xi32>
    %c124_i32_42 = arith.constant 124 : i32
    %142 = tpu.dynamic_rotate %110 by %c124_i32_42 dim 1 : vector<8x128xf32>, i32 -> vector<8x128xf32>
    %cst_43 = arith.constant 0.000000e+00 : f32
    %143 = vector.broadcast %cst_43 : f32 to vector<8x128xf32>
    %144 = arith.select %141, %142, %143 : vector<8x128xi1>, vector<8x128xf32>
    %145 = vector.broadcast %139 : f32 to vector<8x128xf32>
    %146 = arith.mulf %145, %144 : vector<8x128xf32>
    %147 = arith.addf %138, %146 : vector<8x128xf32>
    %c4 = arith.constant 4 : index
    %148 = memref.load %arg5[%c4] : memref<15xf32, #tpu.memory_space<smem>>
    %c124_i32_44 = arith.constant 124 : i32
    %149 = vector.broadcast %c124_i32_44 : i32 to vector<8x128xi32>
    %150 = arith.cmpi sle, %11, %149 : vector<8x128xi32>
    %c125_i32_45 = arith.constant 125 : i32
    %151 = tpu.dynamic_rotate %110 by %c125_i32_45 dim 1 : vector<8x128xf32>, i32 -> vector<8x128xf32>
    %cst_46 = arith.constant 0.000000e+00 : f32
    %152 = vector.broadcast %cst_46 : f32 to vector<8x128xf32>
    %153 = arith.select %150, %151, %152 : vector<8x128xi1>, vector<8x128xf32>
    %154 = vector.broadcast %148 : f32 to vector<8x128xf32>
    %155 = arith.mulf %154, %153 : vector<8x128xf32>
    %156 = arith.addf %147, %155 : vector<8x128xf32>
    %c5 = arith.constant 5 : index
    %157 = memref.load %arg5[%c5] : memref<15xf32, #tpu.memory_space<smem>>
    %c125_i32_47 = arith.constant 125 : i32
    %158 = vector.broadcast %c125_i32_47 : i32 to vector<8x128xi32>
    %159 = arith.cmpi sle, %11, %158 : vector<8x128xi32>
    %c126_i32_48 = arith.constant 126 : i32
    %160 = tpu.dynamic_rotate %110 by %c126_i32_48 dim 1 : vector<8x128xf32>, i32 -> vector<8x128xf32>
    %cst_49 = arith.constant 0.000000e+00 : f32
    %161 = vector.broadcast %cst_49 : f32 to vector<8x128xf32>
    %162 = arith.select %159, %160, %161 : vector<8x128xi1>, vector<8x128xf32>
    %163 = vector.broadcast %157 : f32 to vector<8x128xf32>
    %164 = arith.mulf %163, %162 : vector<8x128xf32>
    %165 = arith.addf %156, %164 : vector<8x128xf32>
    %c6 = arith.constant 6 : index
    %166 = memref.load %arg5[%c6] : memref<15xf32, #tpu.memory_space<smem>>
    %c126_i32_50 = arith.constant 126 : i32
    %167 = vector.broadcast %c126_i32_50 : i32 to vector<8x128xi32>
    %168 = arith.cmpi sle, %11, %167 : vector<8x128xi32>
    %c127_i32_51 = arith.constant 127 : i32
    %169 = tpu.dynamic_rotate %110 by %c127_i32_51 dim 1 : vector<8x128xf32>, i32 -> vector<8x128xf32>
    %cst_52 = arith.constant 0.000000e+00 : f32
    %170 = vector.broadcast %cst_52 : f32 to vector<8x128xf32>
    %171 = arith.select %168, %169, %170 : vector<8x128xi1>, vector<8x128xf32>
    %172 = vector.broadcast %166 : f32 to vector<8x128xf32>
    %173 = arith.mulf %172, %171 : vector<8x128xf32>
    %174 = arith.addf %165, %173 : vector<8x128xf32>
    %c7 = arith.constant 7 : index
    %175 = memref.load %arg5[%c7] : memref<15xf32, #tpu.memory_space<smem>>
    %176 = vector.broadcast %175 : f32 to vector<8x128xf32>
    %177 = arith.mulf %176, %110 : vector<8x128xf32>
    %178 = arith.addf %174, %177 : vector<8x128xf32>
    %c8 = arith.constant 8 : index
    %179 = memref.load %arg5[%c8] : memref<15xf32, #tpu.memory_space<smem>>
    %c1_i32_53 = arith.constant 1 : i32
    %180 = vector.broadcast %c1_i32_53 : i32 to vector<8x128xi32>
    %181 = arith.cmpi sge, %11, %180 : vector<8x128xi32>
    %c1_i32_54 = arith.constant 1 : i32
    %182 = tpu.dynamic_rotate %110 by %c1_i32_54 dim 1 : vector<8x128xf32>, i32 -> vector<8x128xf32>
    %cst_55 = arith.constant 0.000000e+00 : f32
    %183 = vector.broadcast %cst_55 : f32 to vector<8x128xf32>
    %184 = arith.select %181, %182, %183 : vector<8x128xi1>, vector<8x128xf32>
    %185 = vector.broadcast %179 : f32 to vector<8x128xf32>
    %186 = arith.mulf %185, %184 : vector<8x128xf32>
    %187 = arith.addf %178, %186 : vector<8x128xf32>
    %c9 = arith.constant 9 : index
    %188 = memref.load %arg5[%c9] : memref<15xf32, #tpu.memory_space<smem>>
    %c2_i32 = arith.constant 2 : i32
    %189 = vector.broadcast %c2_i32 : i32 to vector<8x128xi32>
    %190 = arith.cmpi sge, %11, %189 : vector<8x128xi32>
    %c2_i32_56 = arith.constant 2 : i32
    %191 = tpu.dynamic_rotate %110 by %c2_i32_56 dim 1 : vector<8x128xf32>, i32 -> vector<8x128xf32>
    %cst_57 = arith.constant 0.000000e+00 : f32
    %192 = vector.broadcast %cst_57 : f32 to vector<8x128xf32>
    %193 = arith.select %190, %191, %192 : vector<8x128xi1>, vector<8x128xf32>
    %194 = vector.broadcast %188 : f32 to vector<8x128xf32>
    %195 = arith.mulf %194, %193 : vector<8x128xf32>
    %196 = arith.addf %187, %195 : vector<8x128xf32>
    %c10 = arith.constant 10 : index
    %197 = memref.load %arg5[%c10] : memref<15xf32, #tpu.memory_space<smem>>
    %c3_i32 = arith.constant 3 : i32
    %198 = vector.broadcast %c3_i32 : i32 to vector<8x128xi32>
    %199 = arith.cmpi sge, %11, %198 : vector<8x128xi32>
    %c3_i32_58 = arith.constant 3 : i32
    %200 = tpu.dynamic_rotate %110 by %c3_i32_58 dim 1 : vector<8x128xf32>, i32 -> vector<8x128xf32>
    %cst_59 = arith.constant 0.000000e+00 : f32
    %201 = vector.broadcast %cst_59 : f32 to vector<8x128xf32>
    %202 = arith.select %199, %200, %201 : vector<8x128xi1>, vector<8x128xf32>
    %203 = vector.broadcast %197 : f32 to vector<8x128xf32>
    %204 = arith.mulf %203, %202 : vector<8x128xf32>
    %205 = arith.addf %196, %204 : vector<8x128xf32>
    %c11 = arith.constant 11 : index
    %206 = memref.load %arg5[%c11] : memref<15xf32, #tpu.memory_space<smem>>
    %c4_i32 = arith.constant 4 : i32
    %207 = vector.broadcast %c4_i32 : i32 to vector<8x128xi32>
    %208 = arith.cmpi sge, %11, %207 : vector<8x128xi32>
    %c4_i32_60 = arith.constant 4 : i32
    %209 = tpu.dynamic_rotate %110 by %c4_i32_60 dim 1 : vector<8x128xf32>, i32 -> vector<8x128xf32>
    %cst_61 = arith.constant 0.000000e+00 : f32
    %210 = vector.broadcast %cst_61 : f32 to vector<8x128xf32>
    %211 = arith.select %208, %209, %210 : vector<8x128xi1>, vector<8x128xf32>
    %212 = vector.broadcast %206 : f32 to vector<8x128xf32>
    %213 = arith.mulf %212, %211 : vector<8x128xf32>
    %214 = arith.addf %205, %213 : vector<8x128xf32>
    %c12 = arith.constant 12 : index
    %215 = memref.load %arg5[%c12] : memref<15xf32, #tpu.memory_space<smem>>
    %c5_i32_62 = arith.constant 5 : i32
    %216 = vector.broadcast %c5_i32_62 : i32 to vector<8x128xi32>
    %217 = arith.cmpi sge, %11, %216 : vector<8x128xi32>
    %c5_i32_63 = arith.constant 5 : i32
    %218 = tpu.dynamic_rotate %110 by %c5_i32_63 dim 1 : vector<8x128xf32>, i32 -> vector<8x128xf32>
    %cst_64 = arith.constant 0.000000e+00 : f32
    %219 = vector.broadcast %cst_64 : f32 to vector<8x128xf32>
    %220 = arith.select %217, %218, %219 : vector<8x128xi1>, vector<8x128xf32>
    %221 = vector.broadcast %215 : f32 to vector<8x128xf32>
    %222 = arith.mulf %221, %220 : vector<8x128xf32>
    %223 = arith.addf %214, %222 : vector<8x128xf32>
    %c13 = arith.constant 13 : index
    %224 = memref.load %arg5[%c13] : memref<15xf32, #tpu.memory_space<smem>>
    %c6_i32 = arith.constant 6 : i32
    %225 = vector.broadcast %c6_i32 : i32 to vector<8x128xi32>
    %226 = arith.cmpi sge, %11, %225 : vector<8x128xi32>
    %c6_i32_65 = arith.constant 6 : i32
    %227 = tpu.dynamic_rotate %110 by %c6_i32_65 dim 1 : vector<8x128xf32>, i32 -> vector<8x128xf32>
    %cst_66 = arith.constant 0.000000e+00 : f32
    %228 = vector.broadcast %cst_66 : f32 to vector<8x128xf32>
    %229 = arith.select %226, %227, %228 : vector<8x128xi1>, vector<8x128xf32>
    %230 = vector.broadcast %224 : f32 to vector<8x128xf32>
    %231 = arith.mulf %230, %229 : vector<8x128xf32>
    %232 = arith.addf %223, %231 : vector<8x128xf32>
    %c14 = arith.constant 14 : index
    %233 = memref.load %arg5[%c14] : memref<15xf32, #tpu.memory_space<smem>>
    %c7_i32 = arith.constant 7 : i32
    %234 = vector.broadcast %c7_i32 : i32 to vector<8x128xi32>
    %235 = arith.cmpi sge, %11, %234 : vector<8x128xi32>
    %c7_i32_67 = arith.constant 7 : i32
    %236 = tpu.dynamic_rotate %110 by %c7_i32_67 dim 1 : vector<8x128xf32>, i32 -> vector<8x128xf32>
    %cst_68 = arith.constant 0.000000e+00 : f32
    %237 = vector.broadcast %cst_68 : f32 to vector<8x128xf32>
    %238 = arith.select %235, %236, %237 : vector<8x128xi1>, vector<8x128xf32>
    %239 = vector.broadcast %233 : f32 to vector<8x128xf32>
    %240 = arith.mulf %239, %238 : vector<8x128xf32>
    %241 = arith.addf %232, %240 : vector<8x128xf32>
    %242 = vector.broadcast %95 : vector<8x1xf32> to vector<8x128xf32>
    %243 = arith.subf %241, %242 : vector<8x128xf32>
    %244 = vector.broadcast %96 : vector<8x1xf32> to vector<8x128xf32>
    %245 = arith.mulf %243, %244 : vector<8x128xf32>
    %246 = arith.subf %245, %9 : vector<8x128xf32>
    %247 = arith.mulf %246, %246 : vector<8x128xf32>
    %cst_69 = arith.constant 2.000000e+00 : f32
    %248 = vector.broadcast %cst_69 : f32 to vector<8x128xf32>
    %249 = arith.mulf %248, %247 : vector<8x128xf32>
    %250 = arith.select %92, %249, %247 : vector<8x128xi1>, vector<8x128xf32>
    %251 = arith.andi %103, %92 : vector<8x128xi1>
    %252 = arith.subf %100, %101 : vector<8x128xf32>
    %253 = math.absf %252 : vector<8x128xf32>
    %cst_70 = arith.constant 0.000000e+00 : f32
    %254 = vector.broadcast %cst_70 : f32 to vector<8x128xf32>
    %255 = arith.select %251, %253, %254 : vector<8x128xi1>, vector<8x128xf32>
    %256 = vector.shape_cast %250 : vector<8x128xf32> to vector<1x8x128xf32>
    %cst_71 = arith.constant dense<0.000000e+00> : vector<1xf32>
    %257 = vector.multi_reduction <add>, %256, %cst_71 [1, 2] : vector<1x8x128xf32> to vector<1xf32>
    %258 = vector.shape_cast %257 : vector<1xf32> to vector<1x1x1xf32>
    %259 = vector.extract %258[0, 0, 0] : f32 from vector<1x1x1xf32>
    %260 = vector.broadcast %259 : f32 to vector<1x1xf32>
    %cst_72 = arith.constant 9.765625E-4 : f32
    %261 = vector.broadcast %cst_72 : f32 to vector<1x1xf32>
    %262 = arith.mulf %260, %261 : vector<1x1xf32>
    %263 = vector.shape_cast %255 : vector<8x128xf32> to vector<1x8x128xf32>
    %cst_73 = arith.constant dense<0.000000e+00> : vector<1xf32>
    %264 = vector.multi_reduction <add>, %263, %cst_73 [1, 2] : vector<1x8x128xf32> to vector<1xf32>
    %265 = vector.shape_cast %264 : vector<1xf32> to vector<1x1x1xf32>
    %266 = vector.extract %265[0, 0, 0] : f32 from vector<1x1x1xf32>
    %267 = vector.broadcast %266 : f32 to vector<1x1xf32>
    %cst_74 = arith.constant 9.842520e-05 : f32
    %268 = vector.broadcast %cst_74 : f32 to vector<1x1xf32>
    %269 = arith.mulf %267, %268 : vector<1x1xf32>
    %270 = arith.addf %262, %269 : vector<1x1xf32>
    %c0_75 = arith.constant 0 : index
    %c0_76 = arith.constant 0 : index
    %271 = vector.load %arg7[%c0_75, %c0_76] : memref<1x1xf32, #tpu.memory_space<vmem>>, vector<1x1xf32>
    tpu.vector_store %arg7[%c0_75, %c0_76], %270 {strides = array<i32>} : memref<1x1xf32, #tpu.memory_space<vmem>>, vector<1x1xf32>,
    return
  }
}

</mosaic_0001>

<llo_original>
// kernel: _fused_call.1
$region0: #{_fused_call.1}
  #allocation0 [shape = 'u32[]', space=smem, size = 0x4, offset = 0x4, fixed_abs, tag = 'smem constant byte address 0x4 - core index']
  #allocation1 [shape = 'u32[144,128]{1,0:T(1,128)}', space=vmem, size = 0x12000, scoped, tag = 'internal scratch']
  %s0 = inlined_call_operand.vmem [shape: f32[8,128], index: 0, kind: input, shape index: {}]
  %s1 = inlined_call_operand.hbm [shape: bf16[128,128], index: 1, kind: input, shape index: {}]
  %s2 = inlined_call_operand.vmem [shape: f32[1,128], index: 2, kind: input, shape index: {}]
  %s3 = inlined_call_operand.vmem [shape: f32[8,128], index: 3, kind: input, shape index: {}]
  %s4 = inlined_call_operand.vmem [shape: f32[8,4], index: 4, kind: input, shape index: {}]
  %s5 = inlined_call_operand.vmem [shape: f32[15], index: 5, kind: input, shape index: {}]
  %s6 = inlined_call_operand.hbm [shape: f32[8,128], index: 6, kind: output, shape index: {0}]
  %s7 = inlined_call_operand.hbm [shape: f32[1,1], index: 7, kind: output, shape index: {1}]
  %8 = xla_tuple %s6, %s7
  %s9 = sld [smem:[#allocation0]]
  $region50: #{_fused_call.1} parent=0
    _
  %s11 = ssub.s32 1, %s9
  %s12 = scalar_select 0, %s11, %s9
  $region1: #{_fused_call.1} parent=0
    #allocation2 [shape = 'u8[32768]{0}', space=vmem, size = 0x8000, scoped, tag = 'input window, operand 1, single buffered']
    #allocation3 [shape = 's32[1]{0}', space=sflag, size = 0x4, scoped, tag = 'scoped memory for _fused_call.1']
    #allocation4 [shape = 's32[1]{0}', space=sflag, size = 0x4, scoped, tag = 'scoped memory for _fused_call.1']
    #allocation5 [shape = 's32[1]{0}', space=sflag, size = 0x4, scoped, tag = 'scoped memory for _fused_call.1']
    #allocation6 [shape = 'u8[512]{0}', space=smem, size = 0x200, scoped, tag = 'input window, operand 5, single buffered']
    #allocation7 [shape = 'u8[4096]{0}', space=vmem, size = 0x1000, scoped, tag = 'output window, operand 0, single buffered']
    #allocation8 [shape = 'u8[512]{0}', space=vmem, size = 0x400, scoped, tag = 'output window, operand 1, single buffered']
    #allocation9 [shape = 's32[1]{0}', space=sflag, size = 0x4, scoped, tag = 'scoped memory for _fused_call.1']
    %13 = vsyncpa [#allocation3], 0
    %14 = vsyncpa [#allocation5], 0
    %15 = vsyncpa [#allocation4], 0
    %16 = vsyncpa [#allocation9], 0
    // Predicated region
    $region2: #{_fused_call.1} parent=1 // pred_check
      _
    $region3: #{_fused_call.1} parent=1 // pred_check_branch
      %18 = sbr.rel (0) target = $region5
    $region4: #{_fused_call.1} parent=1 // pred_region
      _
    $region5: #{_fused_call.1} parent=1 // pred_fallthru
      _
    // Predicated region
    $region6: #{_fused_call.1} parent=1 // pred_check
      _
    $region7: #{_fused_call.1} parent=1 // pred_check_branch
      %20 = sbr.rel (0) target = $region9
    $region8: #{_fused_call.1} parent=1 // pred_region
      %s22 = ssub.s32 1024, 1024
      %23 = vsyncadd [#allocation3], %s22
      %s24 = sshll.u32 [#allocation2], 4
      %s25 = int_to_ptr.vmem [resolvable:$true] %s24
      %30 = dma.hbm_to_vmem [thread:$0]  %s1, 1024, %s25, [#allocation3], 64, 64, 4
    $region9: #{_fused_call.1} parent=1 // pred_fallthru
      _
    // Predicated region
    $region10: #{_fused_call.1} parent=1 // pred_check
      _
    $region11: #{_fused_call.1} parent=1 // pred_check_branch
      %32 = sbr.rel (0) target = $region13
    $region12: #{_fused_call.1} parent=1 // pred_region
      _
    $region13: #{_fused_call.1} parent=1 // pred_fallthru
      _
    // Predicated region
    $region14: #{_fused_call.1} parent=1 // pred_check
      _
    $region15: #{_fused_call.1} parent=1 // pred_check_branch
      %34 = sbr.rel (0) target = $region17
    $region16: #{_fused_call.1} parent=1 // pred_region
      _
    $region17: #{_fused_call.1} parent=1 // pred_fallthru
      _
    // Predicated region
    $region18: #{_fused_call.1} parent=1 // pred_check
      _
    $region19: #{_fused_call.1} parent=1 // pred_check_branch
      %36 = sbr.rel (0) target = $region21
    $region20: #{_fused_call.1} parent=1 // pred_region
      _
    $region21: #{_fused_call.1} parent=1 // pred_fallthru
      _
    // Predicated region
    $region22: #{_fused_call.1} parent=1 // pred_check
      _
    $region23: #{_fused_call.1} parent=1 // pred_check_branch
      %38 = sbr.rel (0) target = $region25
    $region24: #{_fused_call.1} parent=1 // pred_region
      %s40 = ssub.s32 16, 16
      %41 = vsyncadd [#allocation5], %s40
      %s43 = sshll.u32 %s5, 4
      %s44 = int_to_ptr.vmem [resolvable:$true] %s43
      %46 = dma.vmem_to_smem %s44, 16, [#allocation6], [#allocation5]
    $region25: #{_fused_call.1} parent=1 // pred_fallthru
      _
    // Predicated region
    $region26: #{_fused_call.1} parent=1 // pred_check
      _
    $region27: #{_fused_call.1} parent=1 // pred_check_branch
      %48 = sbr.rel (0) target = $region29
    $region28: #{_fused_call.1} parent=1 // pred_region
      %49 = dma.done [#allocation3], 1024
    $region29: #{_fused_call.1} parent=1 // pred_fallthru
      _
    // Predicated region
    $region30: #{_fused_call.1} parent=1 // pred_check
      _
    $region31: #{_fused_call.1} parent=1 // pred_check_branch
      %51 = sbr.rel (0) target = $region33
    $region32: #{_fused_call.1} parent=1 // pred_region
      %52 = dma.done [#allocation5], 16
    $region33: #{_fused_call.1} parent=1 // pred_fallthru
      _
    %53 = sfence
    %v55 = vld [vmem:[%s0] sm:$0xff]
    %v56 = vpack.c.bf16 %v55, %v55
    %v57 = vld [vmem:[#allocation2] sm:$0xf]
    %v58 = vld [vmem:[#allocation2 + $0x4] sm:$0xf]
    %v59 = vld [vmem:[#allocation2 + $0x8] sm:$0xf]
    %v60 = vld [vmem:[#allocation2 + $0xc] sm:$0xf]
    %v61 = vld [vmem:[#allocation2 + $0x10] sm:$0xf]
    %v62 = vld [vmem:[#allocation2 + $0x14] sm:$0xf]
    %v63 = vld [vmem:[#allocation2 + $0x18] sm:$0xf]
    %v64 = vld [vmem:[#allocation2 + $0x1c] sm:$0xf]
    %v65 = vld [vmem:[#allocation2 + $0x20] sm:$0xf]
    %v66 = vld [vmem:[#allocation2 + $0x24] sm:$0xf]
    %v67 = vld [vmem:[#allocation2 + $0x28] sm:$0xf]
    %v68 = vld [vmem:[#allocation2 + $0x2c] sm:$0xf]
    %v69 = vld [vmem:[#allocation2 + $0x30] sm:$0xf]
    %v70 = vld [vmem:[#allocation2 + $0x34] sm:$0xf]
    %v71 = vld [vmem:[#allocation2 + $0x38] sm:$0xf]
    %v72 = vld [vmem:[#allocation2 + $0x3c] sm:$0xf]
    %v73 = vld [vmem:[%s2] sm:$0x1]
    %v75 = vlaneseq
    %v76 = vshrl.u32 %v75, 7
    %v77 = vsub.s32 0, %v76
    %v78 = vrot.slane %v73, %v77
    %v96 = vunpack.c.l.b16 %v57
    %v97 = vunpack.c.l.b16 %v58
    %v98 = vunpack.c.l.b16 %v59
    %v99 = vunpack.c.l.b16 %v60
    %v100 = vunpack.c.l.b16 %v61
    %v101 = vunpack.c.l.b16 %v62
    %v102 = vunpack.c.l.b16 %v63
    %v103 = vunpack.c.l.b16 %v64
    %v104 = vunpack.c.l.b16 %v65
    %v105 = vunpack.c.l.b16 %v66
    %v106 = vunpack.c.l.b16 %v67
    %v107 = vunpack.c.l.b16 %v68
    %v108 = vunpack.c.l.b16 %v69
    %v109 = vunpack.c.l.b16 %v70
    %v110 = vunpack.c.l.b16 %v71
    %v111 = vunpack.c.l.b16 %v72
    %v112 = vpack.c.b16 %v97, %v96
    %v113 = vpack.c.b16 %v99, %v98
    %v114 = vpack.c.b16 %v101, %v100
    %v115 = vpack.c.b16 %v103, %v102
    %v116 = vpack.c.b16 %v105, %v104
    %v117 = vpack.c.b16 %v107, %v106
    %v118 = vpack.c.b16 %v109, %v108
    %v119 = vpack.c.b16 %v111, %v110
    %128 = vmatprep.subr.bf16.mxu0 0
    %129 = vmatpush1.bf16.msra.mxu0 %v112
    %130 = vmatprep.subr.bf16.mxu0 0
    %131 = vmatpush1.bf16.msra.mxu0 %v113
    %132 = vmatprep.subr.bf16.mxu0 0
    %133 = vmatpush1.bf16.msra.mxu0 %v114
    %134 = vmatprep.subr.bf16.mxu0 0
    %135 = vmatpush1.bf16.msra.mxu0 %v115
    %136 = vmatprep.subr.bf16.mxu0 0
    %137 = vmatpush1.bf16.msra.mxu0 %v116
    %138 = vmatprep.subr.bf16.mxu0 0
    %139 = vmatpush1.bf16.msra.mxu0 %v117
    %140 = vmatprep.subr.bf16.mxu0 0
    %141 = vmatpush1.bf16.msra.mxu0 %v118
    %142 = vmatprep.subr.bf16.mxu0 0
    %143 = vmatpush1.bf16.msra.mxu0 %v119
    %144 = vmatprep.subr.bf16.mxu0 0
    %145 = vmatpush1.bf16.msra.mxu0 0
    %146 = vmatprep.subr.bf16.mxu0 0
    %147 = vmatpush1.bf16.msra.mxu0 0
    %148 = vmatprep.subr.bf16.mxu0 0
    %149 = vmatpush1.bf16.msra.mxu0 0
    %150 = vmatprep.subr.bf16.mxu0 0
    %151 = vmatpush1.bf16.msra.mxu0 0
    %152 = vmatprep.subr.bf16.mxu0 0
    %153 = vmatpush1.bf16.msra.mxu0 0
    %154 = vmatprep.subr.bf16.mxu0 0
    %155 = vmatpush1.bf16.msra.mxu0 0
    %156 = vmatprep.subr.bf16.mxu0 0
    %157 = vmatpush1.bf16.msra.mxu0 0
    %158 = vmatprep.subr.bf16.mxu0 0
    %159 = vmatpush1.bf16.msra.mxu0 0
    %160 = vmatprep.mubr.bf16.mxu0 0
    %161 = vmatmul.mubr.bf16.gmra.mrb[0].mxu0 %v56
    %v162 = vpop.f32.mrb[0].mxu0
    %v163 = vadd.f32 %v78, %v162
    %v164 = vpop.f32.mrb[0].mxu0
    %v165 = vpop.f32.mrb[0].mxu0
    %v166 = vpop.f32.mrb[0].mxu0
    %167 = vdwg.mxu0
    %v168 = vtanh.pop %v163
    %169 = vst [vmem:[#allocation7] sm:$0xff] %v168
    %v170 = vld [vmem:[%s3] sm:$0xff]
    %v171 = vld [vmem:[%s4] sm:$0xff]
    %v172 = vlaneseq
    %v173 = vand.u32 %v172, 127
    %174 = vrot.lane.b32.xlu0 %v170, 127
    %v175 = vpop.permute.xlu0 %174
    %v176 = vadd.f32 %v170, %v175
    %177 = vrot.lane.b32.xlu0 %v170, 126
    %v178 = vpop.permute.xlu0 %177
    %v179 = vadd.f32 %v176, %v178
    %180 = vrot.lane.b32.xlu0 %v170, 125
    %v181 = vpop.permute.xlu0 %180
    %v182 = vadd.f32 %v179, %v181
    %183 = vrot.lane.b32.xlu0 %v170, 124
    %v184 = vpop.permute.xlu0 %183
    %v185 = vadd.f32 %v182, %v184
    %186 = vrot.lane.b32.xlu0 %v170, 123
    %v187 = vpop.permute.xlu0 %186
    %v188 = vadd.f32 %v185, %v187
    %189 = vrot.lane.b32.xlu0 %v170, 122
    %v190 = vpop.permute.xlu0 %189
    %v191 = vadd.f32 %v188, %v190
    %192 = vrot.lane.b32.xlu0 %v170, 121
    %v193 = vpop.permute.xlu0 %192
    %v194 = vadd.f32 %v191, %v193
    %195 = vrot.lane.b32.xlu0 %v170, 120
    %v196 = vpop.permute.xlu0 %195
    %v197 = vadd.f32 %v194, %v196
    %198 = vrot.lane.b32.xlu0 %v170, 119
    %v199 = vpop.permute.xlu0 %198
    %v200 = vadd.f32 %v197, %v199
    %v201 = vmul.f32 %v200, 0.1
    %v202 = vsub.f32 %v170, %v201
    %v203 = vmul.f32 %v202, %v202
    %v204 = vsub.f32 %v175, %v201
    %v205 = vmul.f32 %v204, %v204
    %v206 = vadd.f32 %v203, %v205
    %v207 = vsub.f32 %v178, %v201
    %v208 = vmul.f32 %v207, %v207
    %v209 = vadd.f32 %v206, %v208
    %v210 = vsub.f32 %v181, %v201
    %v211 = vmul.f32 %v210, %v210
    %v212 = vadd.f32 %v209, %v211
    %v213 = vsub.f32 %v184, %v201
    %v214 = vmul.f32 %v213, %v213
    %v215 = vadd.f32 %v212, %v214
    %v216 = vsub.f32 %v187, %v201
    %v217 = vmul.f32 %v216, %v216
    %v218 = vadd.f32 %v215, %v217
    %v219 = vsub.f32 %v190, %v201
    %v220 = vmul.f32 %v219, %v219
    %v221 = vadd.f32 %v218, %v220
    %v222 = vsub.f32 %v193, %v201
    %v223 = vmul.f32 %v222, %v222
    %v224 = vadd.f32 %v221, %v223
    %v225 = vsub.f32 %v196, %v201
    %v226 = vmul.f32 %v225, %v225
    %v227 = vadd.f32 %v224, %v226
    %v228 = vsub.f32 %v199, %v201
    %v229 = vmul.f32 %v228, %v228
    %v230 = vadd.f32 %v227, %v229
    %v231 = vmul.f32 %v230, 0.11111111
    %232 = vrot.lane.b32.xlu0 %v231, 5
    %v233 = vpop.permute.xlu0 %232
    %vm234 = vcmp.lt.s32.totalorder %v173, 5
    %vm235 = vcmp.ge.s32.totalorder %v173, 124
    %237 = vset.pattern.permute.xlu0 118
    %238 = vperm.xlu0 %237, %v231
    %v239 = vpop.permute.xlu0 %238
    %v241 = vsel %vm235, %v239, %v233
    %242 = vset.pattern.permute.xlu0 0
    %243 = vperm.xlu0 %242, %v231
    %v244 = vpop.permute.xlu0 %243
    %v246 = vsel %vm234, %v244, %v241
    %247 = vmax.xlane.f32.xlu0 %v246
    %v248 = vpop.xlane.xlu0 %247
    %v249 = vadd.f32 %v248, 1e-08
    %v250 = vmul.f32 %v249, 0.1
    %vm251 = vcmp.lt.f32.partialorder %v246, %v250
    %253 = vset.pattern.permute.xlu0 1
    %254 = vperm.xlu0 %253, %v171
    %v255 = vpop.permute.xlu0 %254
    %v257 = vmul.f32 %v168, %v255
    %258 = vset.pattern.permute.xlu0 0
    %259 = vperm.xlu0 %258, %v171
    %v260 = vpop.permute.xlu0 %259
    %v262 = vadd.f32 %v257, %v260
    %263 = vrot.lane.b32.xlu0 %v262, 1
    %v264 = vpop.permute.xlu0 %263
    %vm265 = vcmp.ge.s32.totalorder %v173, 1
    %v266 = vsub.f32 %v262, %v264
    %v267 = vadd.f32 %v262, %v264
    %v268 = vadd.f32 %v267, 1e-10
    %v269 = vrcp.pop %v268
    %v270 = vmul.f32 %v266, %v269
    %v271 = vsel %vm265, %v270, 0.0
    %s272 = sld [smem:[#allocation6]]
    %vm273 = vcmp.le.s32.totalorder %v173, 120
    %274 = vrot.lane.b32.xlu0 %v271, 121
    %v275 = vpop.permute.xlu0 %274
    %v276 = vsel %vm273, %v275, 0.0
    %v277 = vstv %s272
    %v278 = vmul.f32 %v277, %v276
    %v279 = vadd.f32 %v278, 0.0
    %s280 = sld [smem:[#allocation6 + $0x1]]
    %vm281 = vcmp.le.s32.totalorder %v173, 121
    %282 = vrot.lane.b32.xlu0 %v271, 122
    %v283 = vpop.permute.xlu0 %282
    %v284 = vsel %vm281, %v283, 0.0
    %v285 = vstv %s280
    %v286 = vmul.f32 %v285, %v284
    %v287 = vadd.f32 %v279, %v286
    %s288 = sld [smem:[#allocation6 + $0x2]]
    %vm289 = vcmp.le.s32.totalorder %v173, 122
    %290 = vrot.lane.b32.xlu0 %v271, 123
    %v291 = vpop.permute.xlu0 %290
    %v292 = vsel %vm289, %v291, 0.0
    %v293 = vstv %s288
    %v294 = vmul.f32 %v293, %v292
    %v295 = vadd.f32 %v287, %v294
    %s296 = sld [smem:[#allocation6 + $0x3]]
    %vm297 = vcmp.le.s32.totalorder %v173, 123
    %298 = vrot.lane.b32.xlu0 %v271, 124
    %v299 = vpop.permute.xlu0 %298
    %v300 = vsel %vm297, %v299, 0.0
    %v301 = vstv %s296
    %v302 = vmul.f32 %v301, %v300
    %v303 = vadd.f32 %v295, %v302
    %s304 = sld [smem:[#allocation6 + $0x4]]
    %vm305 = vcmp.le.s32.totalorder %v173, 124
    %306 = vrot.lane.b32.xlu0 %v271, 125
    %v307 = vpop.permute.xlu0 %306
    %v308 = vsel %vm305, %v307, 0.0
    %v309 = vstv %s304
    %v310 = vmul.f32 %v309, %v308
    %v311 = vadd.f32 %v303, %v310
    %s312 = sld [smem:[#allocation6 + $0x5]]
    %vm313 = vcmp.le.s32.totalorder %v173, 125
    %314 = vrot.lane.b32.xlu0 %v271, 126
    %v315 = vpop.permute.xlu0 %314
    %v316 = vsel %vm313, %v315, 0.0
    %v317 = vstv %s312
    %v318 = vmul.f32 %v317, %v316
    %v319 = vadd.f32 %v311, %v318
    %s320 = sld [smem:[#allocation6 + $0x6]]
    %vm321 = vcmp.le.s32.totalorder %v173, 126
    %322 = vrot.lane.b32.xlu0 %v271, 127
    %v323 = vpop.permute.xlu0 %322
    %v324 = vsel %vm321, %v323, 0.0
    %v325 = vstv %s320
    %v326 = vmul.f32 %v325, %v324
    %v327 = vadd.f32 %v319, %v326
    %s328 = sld [smem:[#allocation6 + $0x7]]
    %v329 = vstv %s328
    %v330 = vmul.f32 %v329, %v271
    %v331 = vadd.f32 %v327, %v330
    %s332 = sld [smem:[#allocation6 + $0x8]]
    %333 = vrot.lane.b32.xlu0 %v271, 1
    %v334 = vpop.permute.xlu0 %333
    %v335 = vsel %vm265, %v334, 0.0
    %v336 = vstv %s332
    %v337 = vmul.f32 %v336, %v335
    %v338 = vadd.f32 %v331, %v337
    %s339 = sld [smem:[#allocation6 + $0x9]]
    %vm340 = vcmp.ge.s32.totalorder %v173, 2
    %341 = vrot.lane.b32.xlu0 %v271, 2
    %v342 = vpop.permute.xlu0 %341
    %v343 = vsel %vm340, %v342, 0.0
    %v344 = vstv %s339
    %v345 = vmul.f32 %v344, %v343
    %v346 = vadd.f32 %v338, %v345
    %s347 = sld [smem:[#allocation6 + $0xa]]
    %vm348 = vcmp.ge.s32.totalorder %v173, 3
    %349 = vrot.lane.b32.xlu0 %v271, 3
    %v350 = vpop.permute.xlu0 %349
    %v351 = vsel %vm348, %v350, 0.0
    %v352 = vstv %s347
    %v353 = vmul.f32 %v352, %v351
    %v354 = vadd.f32 %v346, %v353
    %s355 = sld [smem:[#allocation6 + $0xb]]
    %vm356 = vcmp.ge.s32.totalorder %v173, 4
    %357 = vrot.lane.b32.xlu0 %v271, 4
    %v358 = vpop.permute.xlu0 %357
    %v359 = vsel %vm356, %v358, 0.0
    %v360 = vstv %s355
    %v361 = vmul.f32 %v360, %v359
    %v362 = vadd.f32 %v354, %v361
    %s363 = sld [smem:[#allocation6 + $0xc]]
    %vm364 = vcmp.ge.s32.totalorder %v173, 5
    %365 = vrot.lane.b32.xlu0 %v271, 5
    %v366 = vpop.permute.xlu0 %365
    %v367 = vsel %vm364, %v366, 0.0
    %v368 = vstv %s363
    %v369 = vmul.f32 %v368, %v367
    %v370 = vadd.f32 %v362, %v369
    %s371 = sld [smem:[#allocation6 + $0xd]]
    %vm372 = vcmp.ge.s32.totalorder %v173, 6
    %373 = vrot.lane.b32.xlu0 %v271, 6
    %v374 = vpop.permute.xlu0 %373
    %v375 = vsel %vm372, %v374, 0.0
    %v376 = vstv %s371
    %v377 = vmul.f32 %v376, %v375
    %v378 = vadd.f32 %v370, %v377
    %s379 = sld [smem:[#allocation6 + $0xe]]
    %vm380 = vcmp.ge.s32.totalorder %v173, 7
    %381 = vrot.lane.b32.xlu0 %v271, 7
    %v382 = vpop.permute.xlu0 %381
    %v383 = vsel %vm380, %v382, 0.0
    %v384 = vstv %s379
    %v385 = vmul.f32 %v384, %v383
    %v386 = vadd.f32 %v378, %v385
    %387 = vset.pattern.permute.xlu0 2
    %388 = vperm.xlu0 %387, %v171
    %v389 = vpop.permute.xlu0 %388
    %v391 = vsub.f32 %v386, %v389
    %392 = vset.pattern.permute.xlu0 3
    %393 = vperm.xlu0 %392, %v171
    %v394 = vpop.permute.xlu0 %393
    %v396 = vmul.f32 %v391, %v394
    %v397 = vsub.f32 %v396, %v170
    %v398 = vmul.f32 %v397, %v397
    %v399 = vmul.f32 %v398, 2.0
    %v400 = vsel %vm251, %v399, %v398
    %vm401 = vmand %vm265, %vm251
    %v402 = vand.u32 2147483647, %v266
    %v403 = vsel %vm401, %v402, 0.0
    %404 = vadd.xlane.f32.xlu0 %v400
    %v405 = vpop.xlane.xlu0 %404
    %v406 = vrot.slane %v405, 4
    %v407 = vadd.f32 %v405, %v406
    %v408 = vrot.slane %v407, 2
    %v409 = vadd.f32 %v407, %v408
    %v410 = vrot.slane %v409, 1
    %v411 = vadd.f32 %v409, %v410
    %s412 = vtos %v411
    %v413 = vstv %s412
    %v414 = vmul.f32 %v413, 0.0009765625
    %415 = vadd.xlane.f32.xlu0 %v403
    %v416 = vpop.xlane.xlu0 %415
    %v417 = vrot.slane %v416, 4
    %v418 = vadd.f32 %v416, %v417
    %v419 = vrot.slane %v418, 2
    %v420 = vadd.f32 %v418, %v419
    %v421 = vrot.slane %v420, 1
    %v422 = vadd.f32 %v420, %v421
    %s423 = vtos %v422
    %v424 = vstv %s423
    %v425 = vmul.f32 %v424, 9.84252e-05
    %v426 = vadd.f32 %v414, %v425
    %vm427 = vcmask 0
    %428 = vst.msk [vmem:[#allocation8] sm:$0x1] %vm427, %v426
    // Predicated region
    $region34: #{_fused_call.1} parent=1 // pred_check
      _
    $region35: #{_fused_call.1} parent=1 // pred_check_branch
      %430 = sbr.rel (0) target = $region37
    $region36: #{_fused_call.1} parent=1 // pred_region
      %s432 = ssub.s32 128, 128
      %433 = vsyncadd [#allocation4], %s432
      %s435 = sshll.u32 [#allocation7], 4
      %s436 = int_to_ptr.vmem [resolvable:$true] %s435
      %438 = dma.vmem_to_hbm [thread:$0]  %s436, 128, %s6, [#allocation4]
    $region37: #{_fused_call.1} parent=1 // pred_fallthru
      _
    // Predicated region
    $region38: #{_fused_call.1} parent=1 // pred_check
      _
    $region39: #{_fused_call.1} parent=1 // pred_check_branch
      %440 = sbr.rel (0) target = $region41
    $region40: #{_fused_call.1} parent=1 // pred_region
      %s442 = ssub.s32 16, 16
      %443 = vsyncadd [#allocation9], %s442
      %s445 = sshll.u32 [#allocation8], 4
      %s446 = int_to_ptr.vmem [resolvable:$true] %s445
      %448 = dma.vmem_to_hbm [thread:$0]  %s446, 16, %s7, [#allocation9]
    $region41: #{_fused_call.1} parent=1 // pred_fallthru
      _
    // Predicated region
    $region42: #{_fused_call.1} parent=1 // pred_check
      _
    $region43: #{_fused_call.1} parent=1 // pred_check_branch
      %450 = sbr.rel (0) target = $region45
    $region44: #{_fused_call.1} parent=1 // pred_region
      %451 = dma.done [#allocation4], 128
    $region45: #{_fused_call.1} parent=1 // pred_fallthru
      _
    // Predicated region
    $region46: #{_fused_call.1} parent=1 // pred_check
      _
    $region47: #{_fused_call.1} parent=1 // pred_check_branch
      %453 = sbr.rel (0) target = $region49
    $region48: #{_fused_call.1} parent=1 // pred_region
      %454 = dma.done [#allocation9], 16
    $region49: #{_fused_call.1} parent=1 // pred_fallthru
      _
    %455 = vsyncpa [#allocation3], 1
    %456 = vsyncpa [#allocation4], 1
    %457 = vsyncpa [#allocation9], 1
    %458 = vsyncpa [#allocation5], 1

</llo_original>
